<compile_context>
chip_gen: v6e
topology: v6e:2x2x1
jax: 0.10.0
libtpu: 0.0.40
codegen_flags: <defaults>
</compile_context>

<pallas_src>
import jax
import jax.numpy as jnp
from jax.experimental import pallas as pl
from jax.experimental.pallas import tpu as pltpu


def _identity_dma_kernel(x_hbm_ref, o_hbm_ref, sem):
    # Single direct HBM->HBM DMA of the whole tensor; no VMEM staging.
    cp = pltpu.make_async_copy(x_hbm_ref, o_hbm_ref, sem)
    cp.start()
    cp.wait()


def empty_forward(x: jax.Array) -> jax.Array:
    """Identity forward pass implemented as a single HBM->HBM DMA kernel."""
    if x.size == 0:
        # Literal "empty" input: nothing to copy.
        return x

    nbytes = x.size * jnp.dtype(x.dtype).itemsize
    return pl.pallas_call(
        _identity_dma_kernel,
        out_shape=jax.ShapeDtypeStruct(x.shape, x.dtype),
        in_specs=[pl.BlockSpec(memory_space=pl.ANY)],
        out_specs=pl.BlockSpec(memory_space=pl.ANY),
        scratch_shapes=[pltpu.SemaphoreType.DMA(())],
        cost_estimate=pl.CostEstimate(
            flops=0, transcendentals=0, bytes_accessed=2 * nbytes
        ),
    )(x)


if __name__ == "__main__":
    key = jax.random.PRNGKey(0)
    fwd = jax.jit(empty_forward)

    # Small NCHW input consistent with a YOLOv3-style feature map (f32).
    x = jax.random.normal(key, (2, 4, 16, 16), dtype=jnp.float32)
    y = fwd(x)
    jax.block_until_ready(y)
    assert y.shape == x.shape, (y.shape, x.shape)
    assert y.dtype == x.dtype, (y.dtype, x.dtype)
    assert bool(jnp.all(y == x)), "identity kernel output mismatch (f32)"

    # Ragged bf16 case (YOLO-style 13x13 head): no padding/reshape needed with
    # the full-tensor HBM->HBM DMA path.
    xb = jax.random.normal(key, (2, 3, 13, 13), dtype=jnp.bfloat16)
    yb = fwd(xb)
    jax.block_until_ready(yb)
    assert yb.shape == xb.shape and yb.dtype == xb.dtype
    assert bool(jnp.all(yb == xb)), "identity kernel output mismatch (bf16)"

    print("KERNEL_OK")
</pallas_src>

<mosaic_0001>
module attributes {stable_mosaic.version = 11 : i64} {
  func.func @_identity_dma_kernel(%arg0: memref<2x4x16x16xf32, #tpu.memory_space<any>>, %arg1: memref<2x4x16x16xf32, #tpu.memory_space<any>>, %arg2: memref<!tpu.dma_semaphore, #tpu.memory_space<semaphore_mem>>) attributes {dimension_semantics = [], scalar_prefetch = 0 : i64, scratch_operands = 1 : i64, tpu.core_type = #tpu.core_type<tc>} {
    tpu.enqueue_dma source(%arg0 : memref<2x4x16x16xf32, #tpu.memory_space<any>>) target(%arg1 : memref<2x4x16x16xf32, #tpu.memory_space<any>>) target_semaphore(%arg2 : memref<!tpu.dma_semaphore, #tpu.memory_space<semaphore_mem>>)
    tpu.wait_dma2 semaphore(%arg2 : memref<!tpu.dma_semaphore, #tpu.memory_space<semaphore_mem>>) src(%arg0 : memref<2x4x16x16xf32, #tpu.memory_space<any>>) dst(%arg1 : memref<2x4x16x16xf32, #tpu.memory_space<any>>)
    return
  }
}

</mosaic_0001>

<llo_original>
// kernel: empty_forward.1
$region0: #{empty_forward.1}
  #allocation0 [shape = 'u32[]', space=smem, size = 0x4, offset = 0x4, fixed_abs, tag = 'smem constant byte address 0x4 - core index']
  #allocation1 [shape = 'u32[144,128]{1,0:T(1,128)}', space=vmem, size = 0x12000, scoped, tag = 'internal scratch']
  #allocation2 [shape = 's32[1]{0}', space=sflag, size = 0x4, scoped, tag = 'scratch operand']
  #allocation3 [shape = 's32[]', space=sflag, size = 0x4, offset = 0, fixed_abs, tag = 'sflag constant byte address 0x0 - dummy sync flag']
  #allocation4 [shape = 'u32[0]{0}', space=smem, size = 0, offset = 0, fixed_abs, tag = 'smem constant byte address 0x0 - null']
  %s0 = inlined_call_operand.hbm [shape: f32[2,4,16,16], index: 0, kind: input, shape index: {}]
  %s1 = inlined_call_operand.hbm [shape: f32[2,4,16,16], index: 1, kind: output, shape index: {}]
  %s2 = sld [smem:[#allocation0]]
  $region2: #{empty_forward.1} parent=0
    _
  %s4 = ssub.s32 1, %s2
  %s5 = scalar_select 0, %s4, %s2
  %s7 = sshll.u32 1, 14
  %s8 = sxor.u32 4294967295, %s7
  %12 = dma.general %s0, 2048, %s1, [#allocation2], 131072, [#allocation4], 0, 0
  %s13 = smul.u32 2, 4
  %s14 = smul.u32 %s13, 16
  %s15 = smul.u32 %s14, 1
  %s16 = sshll.u32 %s15, 4
  %17 = dma.done [#allocation2], %s16
  %18 = vsyncmov [#allocation2]
  %s19 = vpop.sfrf %18
  %p20 = scmp.eq.s32.totalorder %s19, 0
  %p21 = pneg %p20
  %23 = shalt.err (%p21)

</llo_original>
